<compile_context>
chip_gen: v6e
topology: v6e:2x2x1
jax: 0.10.0
libtpu: 0.0.40
codegen_flags: <defaults>
</compile_context>

<pallas_src>
import math
import functools

import jax
import jax.numpy as jnp
from jax.experimental import pallas as pl
from jax.experimental.pallas import tpu as pltpu


_TARGET_BLOCK_BYTES = 2 << 20  # ~2 MiB per input block


def make_pe_table(max_len, dim, dtype=jnp.float32):
    """Sinusoidal PE table, identical to the PyTorch __init__ (minus batch dim)."""
    position = jnp.arange(0, max_len, dtype=jnp.float32)[:, None]            # (L, 1)
    div_term = jnp.exp(jnp.arange(0, dim, 2, dtype=jnp.float32)
                       * -(math.log(10000.0) / dim))                          # (D/2,)
    pe = jnp.zeros((max_len, dim), dtype=jnp.float32)
    pe = pe.at[:, 0::2].set(jnp.sin(position * div_term))
    pe = pe.at[:, 1::2].set(jnp.cos(position * div_term))
    return pe.astype(dtype)                                                   # (L, D)


def _pe_kernel(emb_ref, pe_ref, out_ref, *, scale):
    # Elementwise scale + add in the input dtype (no f32 upcast: bf16 inputs
    # stay bf16 -> half the vreg pressure and half the HBM write bytes).
    x = emb_ref[...]
    out_ref[...] = x * jnp.asarray(scale, dtype=x.dtype) + pe_ref[...]
    # TODO(synk): nn.Dropout is identity in eval/inference mode; training-mode
    # stochastic dropout (pltpu.prng_*) is intentionally not applied here.


def _pick_tile(n, quantum, rows, itemsize, target_bytes=_TARGET_BLOCK_BYTES):
    """Largest divisor of `n` that is a multiple of `quantum` and keeps
    rows * tile * itemsize <= target_bytes; falls back to the smallest legal
    divisor, or to `n` itself (full-extent block, always legal) if none."""
    divisors = [d for d in range(quantum, n + 1, quantum) if n % d == 0]
    if not divisors:
        return n
    fitting = [d for d in divisors if rows * d * itemsize <= target_bytes]
    return max(fitting) if fitting else min(divisors)


def positional_encoding_forward(emb, pe_table, step=None, *, donate_emb=False):
    """emb: (B, S, D); pe_table: (max_len, D). Returns (B, S, D)."""
    B, S, D = emb.shape
    scale = math.sqrt(D)
    if step:  # faithful to PyTorch `if step:` (step=None or 0 falls to else)
        pe_slice = jnp.broadcast_to(pe_table[step][None, :], (S, D))
    else:
        pe_slice = pe_table[:S, :]
    pe_slice = pe_slice.astype(emb.dtype)                                     # (S, D)
    itemsize = jnp.dtype(emb.dtype).itemsize
    kernel = functools.partial(_pe_kernel, scale=scale)
    aliases = {0: 0} if donate_emb else {}

    if D % 128 == 0:
        # Lane-dense model dims: stream (TS, D) tiles. The PE block index
        # depends only on the outer seq-tile axis, so across the inner batch
        # loop Pallas sees an unchanged block index and skips the PE DMA.
        TS = _pick_tile(S, 8, D, itemsize)
        return pl.pallas_call(
            kernel,
            out_shape=jax.ShapeDtypeStruct((B, S, D), emb.dtype),
            grid_spec=pltpu.PrefetchScalarGridSpec(
                num_scalar_prefetch=0,
                grid=(S // TS, B),
                in_specs=[
                    pl.BlockSpec((None, TS, D), lambda s, b: (b, s, 0)),
                    pl.BlockSpec((TS, D), lambda s, b: (s, 0)),
                ],
                out_specs=pl.BlockSpec((None, TS, D), lambda s, b: (b, s, 0)),
            ),
            compiler_params=pltpu.CompilerParams(
                dimension_semantics=("parallel", "parallel")),
            input_output_aliases=aliases,
        )(emb, pe_slice)

    # Small / odd D (e.g. the D=32 demo): fold S into the lane axis so the
    # output last dim is a multiple of 128 -> full-width vst, no masked stores.
    L = S * D
    emb2 = emb.reshape(B, L)
    pe2 = pe_slice.reshape(1, L)
    TL = _pick_tile(L, 128, B, itemsize)
    out2 = pl.pallas_call(
        kernel,
        out_shape=jax.ShapeDtypeStruct((B, L), emb.dtype),
        grid_spec=pltpu.PrefetchScalarGridSpec(
            num_scalar_prefetch=0,
            grid=(L // TL,),
            in_specs=[
                pl.BlockSpec((B, TL), lambda l: (0, l)),
                pl.BlockSpec((1, TL), lambda l: (0, l)),
            ],
            out_specs=pl.BlockSpec((B, TL), lambda l: (0, l)),
        ),
        compiler_params=pltpu.CompilerParams(
            dimension_semantics=("parallel",)),
        input_output_aliases=aliases,
    )(emb2, pe2)
    return out2.reshape(B, S, D)


if __name__ == "__main__":
    key = jax.random.PRNGKey(0)
    k1, k2 = jax.random.split(key)
    MAX_LEN = 64  # stand-in for max_len=5000 at small scale

    # Path 1: small D (folded, lane-dense flattened path), step=None.
    B, S, D = 2, 8, 32
    emb = jax.random.normal(k1, (B, S, D), dtype=jnp.float32)
    pe_table = make_pe_table(MAX_LEN, D)
    out = jax.block_until_ready(positional_encoding_forward(emb, pe_table))
    ref = emb * jnp.float32(math.sqrt(D)) + pe_table[:S, :][None, :, :]
    assert out.shape == (B, S, D)
    assert jnp.allclose(out, ref, atol=1e-5, rtol=1e-5)

    # Path 1b: step path (single PE position broadcast over the sequence).
    step = 3
    out_step = jax.block_until_ready(
        positional_encoding_forward(emb, pe_table, step=step))
    ref_step = emb * jnp.float32(math.sqrt(D)) + pe_table[step][None, None, :]
    assert jnp.allclose(out_step, ref_step, atol=1e-5, rtol=1e-5)

    # Path 2: lane-dense model dim (tiled (TS, D) streaming path).
    B2, S2, D2 = 2, 8, 128
    emb_ld = jax.random.normal(k2, (B2, S2, D2), dtype=jnp.float32)
    pe_table_ld = make_pe_table(MAX_LEN, D2)
    out_ld = jax.block_until_ready(positional_encoding_forward(emb_ld, pe_table_ld))
    ref_ld = emb_ld * jnp.float32(math.sqrt(D2)) + pe_table_ld[:S2, :][None, :, :]
    assert out_ld.shape == (B2, S2, D2)
    assert jnp.allclose(out_ld, ref_ld, atol=1e-5, rtol=1e-5)

    print("KERNEL_OK")
</pallas_src>

<mosaic_0001>
module attributes {stable_mosaic.version = 11 : i64} {
  func.func @_pe_kernel(%arg0: i32, %arg1: memref<2x256xf32, #tpu.memory_space<vmem>>, %arg2: memref<1x256xf32, #tpu.memory_space<vmem>>, %arg3: memref<2x256xf32, #tpu.memory_space<vmem>>) attributes {dimension_semantics = [#tpu.dimension_semantics<parallel>], iteration_bounds = array<i64: 1>, scalar_prefetch = 0 : i64, scratch_operands = 0 : i64, tpu.core_type = #tpu.core_type<tc>, window_params = [{transform_indices = @transform_0, window_bounds = array<i64: 2, 256>}, {transform_indices = @transform_1, window_bounds = array<i64: 1, 256>}, {transform_indices = @transform_2, window_bounds = array<i64: 2, 256>}]} {
    %c0 = arith.constant 0 : index
    %c0_0 = arith.constant 0 : index
    %0 = vector.load %arg1[%c0, %c0_0] : memref<2x256xf32, #tpu.memory_space<vmem>>, vector<2x256xf32>
    %cst = arith.constant 5.65685415 : f32
    %1 = vector.broadcast %cst : f32 to vector<2x256xf32>
    %2 = arith.mulf %0, %1 : vector<2x256xf32>
    %c0_1 = arith.constant 0 : index
    %c0_2 = arith.constant 0 : index
    %3 = vector.load %arg2[%c0_1, %c0_2] : memref<1x256xf32, #tpu.memory_space<vmem>>, vector<1x256xf32>
    %4 = vector.broadcast %3 : vector<1x256xf32> to vector<2x256xf32>
    %5 = arith.addf %2, %4 : vector<2x256xf32>
    %c0_3 = arith.constant 0 : index
    %c0_4 = arith.constant 0 : index
    %6 = vector.load %arg3[%c0_3, %c0_4] : memref<2x256xf32, #tpu.memory_space<vmem>>, vector<2x256xf32>
    tpu.vector_store %arg3[%c0_3, %c0_4], %5 {strides = array<i32>} : memref<2x256xf32, #tpu.memory_space<vmem>>, vector<2x256xf32>,
    return
  }
  func.func @transform_0(%arg0: i32) -> (i32, i32) {
    %c0_i32 = arith.constant 0 : i32
    %c0_i32_0 = arith.constant 0 : i32
    return %c0_i32, %arg0 : i32, i32
  }
  func.func @transform_1(%arg0: i32) -> (i32, i32) {
    %c0_i32 = arith.constant 0 : i32
    %c0_i32_0 = arith.constant 0 : i32
    return %c0_i32, %arg0 : i32, i32
  }
  func.func @transform_2(%arg0: i32) -> (i32, i32) {
    %c0_i32 = arith.constant 0 : i32
    %c0_i32_0 = arith.constant 0 : i32
    return %c0_i32, %arg0 : i32, i32
  }
}

</mosaic_0001>

<llo_original>
// kernel: tpu_custom_call.1
$region0: #{tpu_custom_call.1}
  #allocation0 [shape = 'u32[]', space=smem, size = 0x4, offset = 0x4, fixed_abs, tag = 'smem constant byte address 0x4 - core index']
  #allocation1 [shape = 'u32[144,128]{1,0:T(1,128)}', space=vmem, size = 0x12000, scoped, tag = 'internal scratch']
  %s0 = inlined_call_operand.hbm [shape: f32[2,256], index: 0, kind: input, shape index: {}]
  %s1 = inlined_call_operand.hbm [shape: f32[1,256], index: 1, kind: input, shape index: {}]
  %s2 = inlined_call_operand.hbm [shape: f32[2,256], index: 2, kind: output, shape index: {}]
  %s3 = sld [smem:[#allocation0]]
  $region26: #{tpu_custom_call.1} parent=0
    _
  %s5 = ssub.s32 1, %s3
  %s6 = scalar_select 0, %s5, %s3
  $region1: #{tpu_custom_call.1} parent=0
    #allocation2 [shape = 'u8[2048]{0}', space=vmem, size = 0x800, scoped, tag = 'input window, operand 0, single buffered']
    #allocation3 [shape = 's32[1]{0}', space=sflag, size = 0x4, scoped, tag = 'scoped memory for tpu_custom_call.1']
    #allocation4 [shape = 's32[1]{0}', space=sflag, size = 0x4, scoped, tag = 'scoped memory for tpu_custom_call.1']
    #allocation5 [shape = 'u8[1024]{0}', space=vmem, size = 0x400, scoped, tag = 'input window, operand 1, single buffered']
    #allocation6 [shape = 's32[1]{0}', space=sflag, size = 0x4, scoped, tag = 'scoped memory for tpu_custom_call.1']
    #allocation7 [shape = 'u8[2048]{0}', space=vmem, size = 0x800, scoped, tag = 'output window, operand 0, single buffered']
    %7 = vsyncpa [#allocation3], 0
    %8 = vsyncpa [#allocation6], 0
    %9 = vsyncpa [#allocation4], 0
    // Predicated region
    $region2: #{tpu_custom_call.1} parent=1 // pred_check
      _
    $region3: #{tpu_custom_call.1} parent=1 // pred_check_branch
      %11 = sbr.rel (0) target = $region5
    $region4: #{tpu_custom_call.1} parent=1 // pred_region
      %s13 = ssub.s32 64, 64
      %14 = vsyncadd [#allocation3], %s13
      %s16 = sshll.u32 [#allocation2], 4
      %s17 = int_to_ptr.vmem [resolvable:$true] %s16
      %19 = dma.hbm_to_vmem [thread:$0]  %s0, 64, %s17, [#allocation3]
    $region5: #{tpu_custom_call.1} parent=1 // pred_fallthru
      _
    // Predicated region
    $region6: #{tpu_custom_call.1} parent=1 // pred_check
      _
    $region7: #{tpu_custom_call.1} parent=1 // pred_check_branch
      %21 = sbr.rel (0) target = $region9
    $region8: #{tpu_custom_call.1} parent=1 // pred_region
      %s23 = ssub.s32 32, 32
      %24 = vsyncadd [#allocation6], %s23
      %s26 = sshll.u32 [#allocation5], 4
      %s27 = int_to_ptr.vmem [resolvable:$true] %s26
      %29 = dma.hbm_to_vmem [thread:$0]  %s1, 32, %s27, [#allocation6]
    $region9: #{tpu_custom_call.1} parent=1 // pred_fallthru
      _
    // Predicated region
    $region10: #{tpu_custom_call.1} parent=1 // pred_check
      _
    $region11: #{tpu_custom_call.1} parent=1 // pred_check_branch
      %31 = sbr.rel (0) target = $region13
    $region12: #{tpu_custom_call.1} parent=1 // pred_region
      %32 = dma.done [#allocation3], 64
    $region13: #{tpu_custom_call.1} parent=1 // pred_fallthru
      _
    // Predicated region
    $region14: #{tpu_custom_call.1} parent=1 // pred_check
      _
    $region15: #{tpu_custom_call.1} parent=1 // pred_check_branch
      %34 = sbr.rel (0) target = $region17
    $region16: #{tpu_custom_call.1} parent=1 // pred_region
      %35 = dma.done [#allocation6], 32
    $region17: #{tpu_custom_call.1} parent=1 // pred_fallthru
      _
    %v36 = vld [vmem:[#allocation2] sm:$0xf]
    %v37 = vmul.f32 %v36, 5.656854
    %v38 = vld [vmem:[#allocation5] sm:$0x3]
    %v40 = vlaneseq
    %v41 = vshrl.u32 %v40, 7
    %v42 = vsub.s32 0, %v41
    %v43 = vrot.slane %v38, %v42
    %v44 = vlaneseq
    %v45 = vshrl.u32 %v44, 7
    %v46 = vsub.s32 1, %v45
    %v47 = vrot.slane %v38, %v46
    %v48 = vcombine.low %v43, %v47
    %v50 = vunpack.c.l.s4 1983009808
    %v51 = vunpack.c.0.s8 %v50
    %v52 = vlaneseq
    %v53 = vshrl.u32 %v52, 7
    %v54 = vsub.s32 %v51, %v53
    %v55 = vrot.slane %v48, %v54
    %v57 = vadd.f32 %v37, %v55
    %58 = vst [vmem:[#allocation7] sm:$0xf] %v57
    // Predicated region
    $region18: #{tpu_custom_call.1} parent=1 // pred_check
      _
    $region19: #{tpu_custom_call.1} parent=1 // pred_check_branch
      %60 = sbr.rel (0) target = $region21
    $region20: #{tpu_custom_call.1} parent=1 // pred_region
      %s62 = ssub.s32 64, 64
      %63 = vsyncadd [#allocation4], %s62
      %s65 = sshll.u32 [#allocation7], 4
      %s66 = int_to_ptr.vmem [resolvable:$true] %s65
      %68 = dma.vmem_to_hbm [thread:$0]  %s66, 64, %s2, [#allocation4]
    $region21: #{tpu_custom_call.1} parent=1 // pred_fallthru
      _
    // Predicated region
    $region22: #{tpu_custom_call.1} parent=1 // pred_check
      _
    $region23: #{tpu_custom_call.1} parent=1 // pred_check_branch
      %70 = sbr.rel (0) target = $region25
    $region24: #{tpu_custom_call.1} parent=1 // pred_region
      %71 = dma.done [#allocation4], 64
    $region25: #{tpu_custom_call.1} parent=1 // pred_fallthru
      _
    %72 = vsyncpa [#allocation3], 1
    %73 = vsyncpa [#allocation6], 1
    %74 = vsyncpa [#allocation4], 1

</llo_original>
